<compile_context>
chip_gen: v7x
topology: tpu7x:2x2x1
jax: 0.10.0
libtpu: 0.0.40
codegen_flags: <defaults>
</compile_context>

<pallas_src>
import functools

import jax
import jax.numpy as jnp
from jax.experimental import pallas as pl
from jax.experimental.pallas import tpu as pltpu


def dnn_lr_kernel(idx_ref, w_ref, lw_ref, lb_ref, out_ref, h_ref, *, num_fields):
    # idx_ref : SMEM (B_pad*F,) int32 -- precombined indices (field offsets folded
    #           in, masked fields remapped to the zero row), flattened row-major.
    # w_ref   : VMEM (V+1, E)         -- embedding table + trailing zero row (pinned).
    # lw_ref  : VMEM (1, E)           -- LR head weight (row layout, pinned).
    # lb_ref  : VMEM (1, 1)           -- LR head bias (pinned).
    # out_ref : VMEM (1, TB)          -- lane-dense output tile.
    # h_ref   : VMEM (TB, E) f32      -- scratch: field-summed embeddings for this tile.
    tb = h_ref.shape[0]
    base = pl.program_id(0) * tb

    def row_body(b, carry):
        # Gather + accumulate the F field embeddings for row (base + b).
        # Accumulation stays in vregs; only one (1, E) store per row.
        # NOTE: indices are assumed in-range (as in the PyTorch module); an OOB
        # index would silently read arbitrary VMEM.
        row_start = (base + b) * num_fields
        acc = w_ref[idx_ref[row_start]].astype(jnp.float32)
        for f in range(1, num_fields):                 # F is small & static: unrolled
            acc = acc + w_ref[idx_ref[row_start + f]].astype(jnp.float32)
        h_ref[b, :] = acc                              # h = x_emb.sum(dim=1)
        return carry

    jax.lax.fori_loop(0, tb, row_body, 0, unroll=8)

    # LR head on the whole tile: one dense (TB, E) VPU multiply + lane reduction
    # (no N=1 MXU matmul), stored as a single lane-dense (1, TB) block.
    h = h_ref[...]
    row = jnp.sum(h * lw_ref[...], axis=-1)            # (TB,)
    out_ref[...] = (row[None, :] + lb_ref[...]).astype(out_ref.dtype)


def dnn_forward(x, field_mask, field_dims, w, lw, lb, *, tb=None):
    """LR-backbone, train-mode forward of DNN.

    x: (B, F) int per-field indices; field_mask: (F,) bool; field_dims: (F,) int;
    w: (V, E) embedding table; lw: (E, 1) head weight (transposed); lb: (1, 1) bias.
    Returns (B, 1) float32.
    """
    B, F = x.shape
    V, E = w.shape

    # field_dims_ = exclusive cumsum of field_dims (module constant from __init__).
    cum = jnp.cumsum(field_dims.astype(jnp.int32))
    offsets = jnp.concatenate([jnp.zeros((1,), jnp.int32), cum[:-1]])

    # Fold offsets into the indices host-side and remap masked fields to a
    # dedicated all-zeros row (index V) appended to the table.
    x_off = x.astype(jnp.int32) + offsets[None, :]
    zero_row = jnp.int32(V)
    x_idx = jnp.where(field_mask[None, :], x_off, zero_row)
    w_aug = jnp.concatenate(
        [w.astype(jnp.float32), jnp.zeros((1, E), jnp.float32)], axis=0)  # (V+1, E)

    # Batch tile: multiple of 8, capped at 512; >= 2 grid steps for moderate
    # batches so the "parallel" axis can shard across both TensorCores on v7x.
    if tb is None:
        b8 = -(-B // 8) * 8
        tb = b8 if b8 <= 16 else min(512, -(-(b8 // 2) // 8) * 8)
    b_pad = -(-B // tb) * tb
    n_tiles = b_pad // tb

    # Padded rows gather the zero row; their outputs are discarded.
    x_pad = jnp.full((b_pad, F), zero_row, jnp.int32).at[:B].set(x_idx)
    idx_flat = x_pad.reshape(-1)          # 1-D SMEM scalar-prefetch array

    lw_row = lw.reshape(1, E).astype(jnp.float32)
    lb_2d = lb.reshape(1, 1).astype(jnp.float32)

    # VMEM budget: pinned table (double-buffered by the pipeline), the per-tile
    # out/scratch buffers, plus headroom -- capped to this generation's physical
    # VMEM (v7x has only 64 MiB per TensorCore).
    table_bytes = int(w_aug.shape[0]) * int(E) * 4
    tile_bytes = tb * E * 4 + 2 * tb * 4 + 2 * E * 4 + 8
    try:
        vmem_cap = int(pltpu.get_tpu_info().vmem_capacity_bytes)
    except Exception:
        vmem_cap = 64 * 1024 * 1024       # conservative (v7x per-TC) fallback
    vmem_limit = 2 * table_bytes + 2 * tile_bytes + (4 << 20)
    vmem_limit = int(min(max(vmem_limit, 32 << 20), vmem_cap - (2 << 20)))

    grid_spec = pltpu.PrefetchScalarGridSpec(
        num_scalar_prefetch=1,                                    # idx_flat -> SMEM
        grid=(n_tiles,),
        in_specs=[
            pl.BlockSpec((V + 1, E), lambda i, *_: (0, 0)),       # table, pinned
            pl.BlockSpec((1, E), lambda i, *_: (0, 0)),           # head weight, pinned
            pl.BlockSpec((1, 1), lambda i, *_: (0, 0)),           # head bias, pinned
        ],
        out_specs=pl.BlockSpec((1, tb), lambda i, *_: (i, 0)),    # lane-dense output
        scratch_shapes=[pltpu.VMEM((tb, E), jnp.float32)],
    )

    out_tiles = pl.pallas_call(
        functools.partial(dnn_lr_kernel, num_fields=F),
        grid_spec=grid_spec,
        out_shape=jax.ShapeDtypeStruct((n_tiles, tb), jnp.float32),
        compiler_params=pltpu.CompilerParams(
            dimension_semantics=("parallel",),
            vmem_limit_bytes=vmem_limit,
        ),
    )(idx_flat, w_aug, lw_row, lb_2d)

    return out_tiles.reshape(b_pad, 1)[:B]


if __name__ == "__main__":
    key = jax.random.PRNGKey(0)
    k_w, k_lw, k_lb, k_x = jax.random.split(key, 4)

    # Small synthetic config consistent with the module.
    field_dims = jnp.array([3, 5, 4, 4], dtype=jnp.int32)   # F = 4 fields
    V = int(field_dims.sum())                               # total vocab = 16
    E = 8                                                   # embedding_size
    B = 8                                                   # batch

    # Deterministic parameter init (shapes from __init__):
    #   self.w : (sum(field_dims), embedding_size), xavier_uniform_
    bound = (6.0 / (V + E)) ** 0.5
    w = jax.random.uniform(k_w, (V, E), jnp.float32, -bound, bound)
    #   nn.Linear(embedding_size, 1): weight stored transposed -> (E, 1), bias -> (1, 1)
    lin_bound = 1.0 / (E ** 0.5)
    lw = jax.random.uniform(k_lw, (E, 1), jnp.float32, -lin_bound, lin_bound)
    lb = jax.random.uniform(k_lb, (1, 1), jnp.float32, -lin_bound, lin_bound)

    # Per-field categorical indices in [0, field_dims[f]).
    u = jax.random.uniform(k_x, (B, 4), jnp.float32)
    x = jnp.floor(u * field_dims[None, :].astype(jnp.float32)).astype(jnp.int32)
    field_mask = jnp.array([True, True, False, True])

    out = dnn_forward(x, field_mask, field_dims, w, lw, lb)
    out = jax.block_until_ready(out)

    # Pure-JAX reference for the same semantics.
    cum = jnp.cumsum(field_dims)
    offsets = jnp.concatenate([jnp.zeros((1,), jnp.int32), cum[:-1]])
    x_off = x + offsets[None, :]
    x_emb = w[x_off] * field_mask[None, :, None].astype(jnp.float32)
    h_ref = x_emb.sum(axis=1)
    out_ref = h_ref @ lw + lb

    assert out.shape == (B, 1)
    assert jnp.allclose(out, out_ref, atol=1e-5, rtol=1e-5), (out, out_ref)
    print("KERNEL_OK")
</pallas_src>

<mosaic_0001>
module attributes {stable_mosaic.version = 11 : i64} {
  func.func @dnn_lr_kernel(%arg0: i32, %arg1: memref<32xi32, #tpu.memory_space<smem>>, %arg2: memref<17x8xf32, #tpu.memory_space<vmem>>, %arg3: memref<1x8xf32, #tpu.memory_space<vmem>>, %arg4: memref<1x1xf32, #tpu.memory_space<vmem>>, %arg5: memref<1x8xf32, #tpu.memory_space<vmem>>, %arg6: memref<8x8xf32, #tpu.memory_space<vmem>>) attributes {dimension_semantics = [#tpu.dimension_semantics<parallel>], iteration_bounds = array<i64: 1>, scalar_prefetch = 1 : i64, scratch_operands = 1 : i64, tpu.core_type = #tpu.core_type<tc>, window_params = [{pipeline_mode = #tpu.pipeline_mode<synchronous>, transform_indices = @transform_0, window_bounds = array<i64: 17, 8>}, {pipeline_mode = #tpu.pipeline_mode<synchronous>, transform_indices = @transform_1, window_bounds = array<i64: 1, 8>}, {pipeline_mode = #tpu.pipeline_mode<synchronous>, transform_indices = @transform_2, window_bounds = array<i64: 1, 1>}, {transform_indices = @transform_3, window_bounds = array<i64: 1, 8>}]} {
    %c8_i32 = arith.constant 8 : i32
    %0 = arith.muli %arg0, %c8_i32 : i32
    %c0_i32 = arith.constant 0 : i32
    %1 = arith.addi %0, %c0_i32 : i32
    %c4_i32 = arith.constant 4 : i32
    %2 = arith.muli %1, %c4_i32 : i32
    %3 = arith.index_cast %2 : i32 to index
    %4 = memref.load %arg1[%3] : memref<32xi32, #tpu.memory_space<smem>>
    %5 = arith.index_cast %4 : i32 to index
    %c0 = arith.constant 0 : index
    %6 = vector.load %arg2[%5, %c0] : memref<17x8xf32, #tpu.memory_space<vmem>>, vector<1x8xf32>
    %7 = vector.shape_cast %6 : vector<1x8xf32> to vector<8xf32>
    %c1_i32 = arith.constant 1 : i32
    %8 = arith.addi %2, %c1_i32 : i32
    %9 = arith.index_cast %8 : i32 to index
    %10 = memref.load %arg1[%9] : memref<32xi32, #tpu.memory_space<smem>>
    %11 = arith.index_cast %10 : i32 to index
    %c0_0 = arith.constant 0 : index
    %12 = vector.load %arg2[%11, %c0_0] : memref<17x8xf32, #tpu.memory_space<vmem>>, vector<1x8xf32>
    %13 = vector.shape_cast %12 : vector<1x8xf32> to vector<8xf32>
    %14 = arith.addf %7, %13 : vector<8xf32>
    %c2_i32 = arith.constant 2 : i32
    %15 = arith.addi %2, %c2_i32 : i32
    %16 = arith.index_cast %15 : i32 to index
    %17 = memref.load %arg1[%16] : memref<32xi32, #tpu.memory_space<smem>>
    %18 = arith.index_cast %17 : i32 to index
    %c0_1 = arith.constant 0 : index
    %19 = vector.load %arg2[%18, %c0_1] : memref<17x8xf32, #tpu.memory_space<vmem>>, vector<1x8xf32>
    %20 = vector.shape_cast %19 : vector<1x8xf32> to vector<8xf32>
    %21 = arith.addf %14, %20 : vector<8xf32>
    %c3_i32 = arith.constant 3 : i32
    %22 = arith.addi %2, %c3_i32 : i32
    %23 = arith.index_cast %22 : i32 to index
    %24 = memref.load %arg1[%23] : memref<32xi32, #tpu.memory_space<smem>>
    %25 = arith.index_cast %24 : i32 to index
    %c0_2 = arith.constant 0 : index
    %26 = vector.load %arg2[%25, %c0_2] : memref<17x8xf32, #tpu.memory_space<vmem>>, vector<1x8xf32>
    %27 = vector.shape_cast %26 : vector<1x8xf32> to vector<8xf32>
    %28 = arith.addf %21, %27 : vector<8xf32>
    %29 = arith.index_cast %c0_i32 : i32 to index
    %c0_3 = arith.constant 0 : index
    %30 = vector.load %arg6[%29, %c0_3] : memref<8x8xf32, #tpu.memory_space<vmem>>, vector<1x8xf32>
    %31 = vector.shape_cast %30 : vector<1x8xf32> to vector<8xf32>
    %32 = vector.shape_cast %28 : vector<8xf32> to vector<1x8xf32>
    tpu.vector_store %arg6[%29, %c0_3], %32 {strides = array<i32>} : memref<8x8xf32, #tpu.memory_space<vmem>>, vector<1x8xf32>,
    %c1_i32_4 = arith.constant 1 : i32
    %33 = arith.addi %0, %c1_i32_4 : i32
    %c4_i32_5 = arith.constant 4 : i32
    %34 = arith.muli %33, %c4_i32_5 : i32
    %35 = arith.index_cast %34 : i32 to index
    %36 = memref.load %arg1[%35] : memref<32xi32, #tpu.memory_space<smem>>
    %37 = arith.index_cast %36 : i32 to index
    %c0_6 = arith.constant 0 : index
    %38 = vector.load %arg2[%37, %c0_6] : memref<17x8xf32, #tpu.memory_space<vmem>>, vector<1x8xf32>
    %39 = vector.shape_cast %38 : vector<1x8xf32> to vector<8xf32>
    %c1_i32_7 = arith.constant 1 : i32
    %40 = arith.addi %34, %c1_i32_7 : i32
    %41 = arith.index_cast %40 : i32 to index
    %42 = memref.load %arg1[%41] : memref<32xi32, #tpu.memory_space<smem>>
    %43 = arith.index_cast %42 : i32 to index
    %c0_8 = arith.constant 0 : index
    %44 = vector.load %arg2[%43, %c0_8] : memref<17x8xf32, #tpu.memory_space<vmem>>, vector<1x8xf32>
    %45 = vector.shape_cast %44 : vector<1x8xf32> to vector<8xf32>
    %46 = arith.addf %39, %45 : vector<8xf32>
    %c2_i32_9 = arith.constant 2 : i32
    %47 = arith.addi %34, %c2_i32_9 : i32
    %48 = arith.index_cast %47 : i32 to index
    %49 = memref.load %arg1[%48] : memref<32xi32, #tpu.memory_space<smem>>
    %50 = arith.index_cast %49 : i32 to index
    %c0_10 = arith.constant 0 : index
    %51 = vector.load %arg2[%50, %c0_10] : memref<17x8xf32, #tpu.memory_space<vmem>>, vector<1x8xf32>
    %52 = vector.shape_cast %51 : vector<1x8xf32> to vector<8xf32>
    %53 = arith.addf %46, %52 : vector<8xf32>
    %c3_i32_11 = arith.constant 3 : i32
    %54 = arith.addi %34, %c3_i32_11 : i32
    %55 = arith.index_cast %54 : i32 to index
    %56 = memref.load %arg1[%55] : memref<32xi32, #tpu.memory_space<smem>>
    %57 = arith.index_cast %56 : i32 to index
    %c0_12 = arith.constant 0 : index
    %58 = vector.load %arg2[%57, %c0_12] : memref<17x8xf32, #tpu.memory_space<vmem>>, vector<1x8xf32>
    %59 = vector.shape_cast %58 : vector<1x8xf32> to vector<8xf32>
    %60 = arith.addf %53, %59 : vector<8xf32>
    %61 = arith.index_cast %c1_i32_4 : i32 to index
    %c0_13 = arith.constant 0 : index
    %62 = vector.load %arg6[%61, %c0_13] : memref<8x8xf32, #tpu.memory_space<vmem>>, vector<1x8xf32>
    %63 = vector.shape_cast %62 : vector<1x8xf32> to vector<8xf32>
    %64 = vector.shape_cast %60 : vector<8xf32> to vector<1x8xf32>
    tpu.vector_store %arg6[%61, %c0_13], %64 {strides = array<i32>} : memref<8x8xf32, #tpu.memory_space<vmem>>, vector<1x8xf32>,
    %c2_i32_14 = arith.constant 2 : i32
    %65 = arith.addi %0, %c2_i32_14 : i32
    %c4_i32_15 = arith.constant 4 : i32
    %66 = arith.muli %65, %c4_i32_15 : i32
    %67 = arith.index_cast %66 : i32 to index
    %68 = memref.load %arg1[%67] : memref<32xi32, #tpu.memory_space<smem>>
    %69 = arith.index_cast %68 : i32 to index
    %c0_16 = arith.constant 0 : index
    %70 = vector.load %arg2[%69, %c0_16] : memref<17x8xf32, #tpu.memory_space<vmem>>, vector<1x8xf32>
    %71 = vector.shape_cast %70 : vector<1x8xf32> to vector<8xf32>
    %c1_i32_17 = arith.constant 1 : i32
    %72 = arith.addi %66, %c1_i32_17 : i32
    %73 = arith.index_cast %72 : i32 to index
    %74 = memref.load %arg1[%73] : memref<32xi32, #tpu.memory_space<smem>>
    %75 = arith.index_cast %74 : i32 to index
    %c0_18 = arith.constant 0 : index
    %76 = vector.load %arg2[%75, %c0_18] : memref<17x8xf32, #tpu.memory_space<vmem>>, vector<1x8xf32>
    %77 = vector.shape_cast %76 : vector<1x8xf32> to vector<8xf32>
    %78 = arith.addf %71, %77 : vector<8xf32>
    %c2_i32_19 = arith.constant 2 : i32
    %79 = arith.addi %66, %c2_i32_19 : i32
    %80 = arith.index_cast %79 : i32 to index
    %81 = memref.load %arg1[%80] : memref<32xi32, #tpu.memory_space<smem>>
    %82 = arith.index_cast %81 : i32 to index
    %c0_20 = arith.constant 0 : index
    %83 = vector.load %arg2[%82, %c0_20] : memref<17x8xf32, #tpu.memory_space<vmem>>, vector<1x8xf32>
    %84 = vector.shape_cast %83 : vector<1x8xf32> to vector<8xf32>
    %85 = arith.addf %78, %84 : vector<8xf32>
    %c3_i32_21 = arith.constant 3 : i32
    %86 = arith.addi %66, %c3_i32_21 : i32
    %87 = arith.index_cast %86 : i32 to index
    %88 = memref.load %arg1[%87] : memref<32xi32, #tpu.memory_space<smem>>
    %89 = arith.index_cast %88 : i32 to index
    %c0_22 = arith.constant 0 : index
    %90 = vector.load %arg2[%89, %c0_22] : memref<17x8xf32, #tpu.memory_space<vmem>>, vector<1x8xf32>
    %91 = vector.shape_cast %90 : vector<1x8xf32> to vector<8xf32>
    %92 = arith.addf %85, %91 : vector<8xf32>
    %93 = arith.index_cast %c2_i32_14 : i32 to index
    %c0_23 = arith.constant 0 : index
    %94 = vector.load %arg6[%93, %c0_23] : memref<8x8xf32, #tpu.memory_space<vmem>>, vector<1x8xf32>
    %95 = vector.shape_cast %94 : vector<1x8xf32> to vector<8xf32>
    %96 = vector.shape_cast %92 : vector<8xf32> to vector<1x8xf32>
    tpu.vector_store %arg6[%93, %c0_23], %96 {strides = array<i32>} : memref<8x8xf32, #tpu.memory_space<vmem>>, vector<1x8xf32>,
    %c3_i32_24 = arith.constant 3 : i32
    %97 = arith.addi %0, %c3_i32_24 : i32
    %c4_i32_25 = arith.constant 4 : i32
    %98 = arith.muli %97, %c4_i32_25 : i32
    %99 = arith.index_cast %98 : i32 to index
    %100 = memref.load %arg1[%99] : memref<32xi32, #tpu.memory_space<smem>>
    %101 = arith.index_cast %100 : i32 to index
    %c0_26 = arith.constant 0 : index
    %102 = vector.load %arg2[%101, %c0_26] : memref<17x8xf32, #tpu.memory_space<vmem>>, vector<1x8xf32>
    %103 = vector.shape_cast %102 : vector<1x8xf32> to vector<8xf32>
    %c1_i32_27 = arith.constant 1 : i32
    %104 = arith.addi %98, %c1_i32_27 : i32
    %105 = arith.index_cast %104 : i32 to index
    %106 = memref.load %arg1[%105] : memref<32xi32, #tpu.memory_space<smem>>
    %107 = arith.index_cast %106 : i32 to index
    %c0_28 = arith.constant 0 : index
    %108 = vector.load %arg2[%107, %c0_28] : memref<17x8xf32, #tpu.memory_space<vmem>>, vector<1x8xf32>
    %109 = vector.shape_cast %108 : vector<1x8xf32> to vector<8xf32>
    %110 = arith.addf %103, %109 : vector<8xf32>
    %c2_i32_29 = arith.constant 2 : i32
    %111 = arith.addi %98, %c2_i32_29 : i32
    %112 = arith.index_cast %111 : i32 to index
    %113 = memref.load %arg1[%112] : memref<32xi32, #tpu.memory_space<smem>>
    %114 = arith.index_cast %113 : i32 to index
    %c0_30 = arith.constant 0 : index
    %115 = vector.load %arg2[%114, %c0_30] : memref<17x8xf32, #tpu.memory_space<vmem>>, vector<1x8xf32>
    %116 = vector.shape_cast %115 : vector<1x8xf32> to vector<8xf32>
    %117 = arith.addf %110, %116 : vector<8xf32>
    %c3_i32_31 = arith.constant 3 : i32
    %118 = arith.addi %98, %c3_i32_31 : i32
    %119 = arith.index_cast %118 : i32 to index
    %120 = memref.load %arg1[%119] : memref<32xi32, #tpu.memory_space<smem>>
    %121 = arith.index_cast %120 : i32 to index
    %c0_32 = arith.constant 0 : index
    %122 = vector.load %arg2[%121, %c0_32] : memref<17x8xf32, #tpu.memory_space<vmem>>, vector<1x8xf32>
    %123 = vector.shape_cast %122 : vector<1x8xf32> to vector<8xf32>
    %124 = arith.addf %117, %123 : vector<8xf32>
    %125 = arith.index_cast %c3_i32_24 : i32 to index
    %c0_33 = arith.constant 0 : index
    %126 = vector.load %arg6[%125, %c0_33] : memref<8x8xf32, #tpu.memory_space<vmem>>, vector<1x8xf32>
    %127 = vector.shape_cast %126 : vector<1x8xf32> to vector<8xf32>
    %128 = vector.shape_cast %124 : vector<8xf32> to vector<1x8xf32>
    tpu.vector_store %arg6[%125, %c0_33], %128 {strides = array<i32>} : memref<8x8xf32, #tpu.memory_space<vmem>>, vector<1x8xf32>,
    %c4_i32_34 = arith.constant 4 : i32
    %129 = arith.addi %0, %c4_i32_34 : i32
    %c4_i32_35 = arith.constant 4 : i32
    %130 = arith.muli %129, %c4_i32_35 : i32
    %131 = arith.index_cast %130 : i32 to index
    %132 = memref.load %arg1[%131] : memref<32xi32, #tpu.memory_space<smem>>
    %133 = arith.index_cast %132 : i32 to index
    %c0_36 = arith.constant 0 : index
    %134 = vector.load %arg2[%133, %c0_36] : memref<17x8xf32, #tpu.memory_space<vmem>>, vector<1x8xf32>
    %135 = vector.shape_cast %134 : vector<1x8xf32> to vector<8xf32>
    %c1_i32_37 = arith.constant 1 : i32
    %136 = arith.addi %130, %c1_i32_37 : i32
    %137 = arith.index_cast %136 : i32 to index
    %138 = memref.load %arg1[%137] : memref<32xi32, #tpu.memory_space<smem>>
    %139 = arith.index_cast %138 : i32 to index
    %c0_38 = arith.constant 0 : index
    %140 = vector.load %arg2[%139, %c0_38] : memref<17x8xf32, #tpu.memory_space<vmem>>, vector<1x8xf32>
    %141 = vector.shape_cast %140 : vector<1x8xf32> to vector<8xf32>
    %142 = arith.addf %135, %141 : vector<8xf32>
    %c2_i32_39 = arith.constant 2 : i32
    %143 = arith.addi %130, %c2_i32_39 : i32
    %144 = arith.index_cast %143 : i32 to index
    %145 = memref.load %arg1[%144] : memref<32xi32, #tpu.memory_space<smem>>
    %146 = arith.index_cast %145 : i32 to index
    %c0_40 = arith.constant 0 : index
    %147 = vector.load %arg2[%146, %c0_40] : memref<17x8xf32, #tpu.memory_space<vmem>>, vector<1x8xf32>
    %148 = vector.shape_cast %147 : vector<1x8xf32> to vector<8xf32>
    %149 = arith.addf %142, %148 : vector<8xf32>
    %c3_i32_41 = arith.constant 3 : i32
    %150 = arith.addi %130, %c3_i32_41 : i32
    %151 = arith.index_cast %150 : i32 to index
    %152 = memref.load %arg1[%151] : memref<32xi32, #tpu.memory_space<smem>>
    %153 = arith.index_cast %152 : i32 to index
    %c0_42 = arith.constant 0 : index
    %154 = vector.load %arg2[%153, %c0_42] : memref<17x8xf32, #tpu.memory_space<vmem>>, vector<1x8xf32>
    %155 = vector.shape_cast %154 : vector<1x8xf32> to vector<8xf32>
    %156 = arith.addf %149, %155 : vector<8xf32>
    %157 = arith.index_cast %c4_i32_34 : i32 to index
    %c0_43 = arith.constant 0 : index
    %158 = vector.load %arg6[%157, %c0_43] : memref<8x8xf32, #tpu.memory_space<vmem>>, vector<1x8xf32>
    %159 = vector.shape_cast %158 : vector<1x8xf32> to vector<8xf32>
    %160 = vector.shape_cast %156 : vector<8xf32> to vector<1x8xf32>
    tpu.vector_store %arg6[%157, %c0_43], %160 {strides = array<i32>} : memref<8x8xf32, #tpu.memory_space<vmem>>, vector<1x8xf32>,
    %c5_i32 = arith.constant 5 : i32
    %161 = arith.addi %0, %c5_i32 : i32
    %c4_i32_44 = arith.constant 4 : i32
    %162 = arith.muli %161, %c4_i32_44 : i32
    %163 = arith.index_cast %162 : i32 to index
    %164 = memref.load %arg1[%163] : memref<32xi32, #tpu.memory_space<smem>>
    %165 = arith.index_cast %164 : i32 to index
    %c0_45 = arith.constant 0 : index
    %166 = vector.load %arg2[%165, %c0_45] : memref<17x8xf32, #tpu.memory_space<vmem>>, vector<1x8xf32>
    %167 = vector.shape_cast %166 : vector<1x8xf32> to vector<8xf32>
    %c1_i32_46 = arith.constant 1 : i32
    %168 = arith.addi %162, %c1_i32_46 : i32
    %169 = arith.index_cast %168 : i32 to index
    %170 = memref.load %arg1[%169] : memref<32xi32, #tpu.memory_space<smem>>
    %171 = arith.index_cast %170 : i32 to index
    %c0_47 = arith.constant 0 : index
    %172 = vector.load %arg2[%171, %c0_47] : memref<17x8xf32, #tpu.memory_space<vmem>>, vector<1x8xf32>
    %173 = vector.shape_cast %172 : vector<1x8xf32> to vector<8xf32>
    %174 = arith.addf %167, %173 : vector<8xf32>
    %c2_i32_48 = arith.constant 2 : i32
    %175 = arith.addi %162, %c2_i32_48 : i32
    %176 = arith.index_cast %175 : i32 to index
    %177 = memref.load %arg1[%176] : memref<32xi32, #tpu.memory_space<smem>>
    %178 = arith.index_cast %177 : i32 to index
    %c0_49 = arith.constant 0 : index
    %179 = vector.load %arg2[%178, %c0_49] : memref<17x8xf32, #tpu.memory_space<vmem>>, vector<1x8xf32>
    %180 = vector.shape_cast %179 : vector<1x8xf32> to vector<8xf32>
    %181 = arith.addf %174, %180 : vector<8xf32>
    %c3_i32_50 = arith.constant 3 : i32
    %182 = arith.addi %162, %c3_i32_50 : i32
    %183 = arith.index_cast %182 : i32 to index
    %184 = memref.load %arg1[%183] : memref<32xi32, #tpu.memory_space<smem>>
    %185 = arith.index_cast %184 : i32 to index
    %c0_51 = arith.constant 0 : index
    %186 = vector.load %arg2[%185, %c0_51] : memref<17x8xf32, #tpu.memory_space<vmem>>, vector<1x8xf32>
    %187 = vector.shape_cast %186 : vector<1x8xf32> to vector<8xf32>
    %188 = arith.addf %181, %187 : vector<8xf32>
    %189 = arith.index_cast %c5_i32 : i32 to index
    %c0_52 = arith.constant 0 : index
    %190 = vector.load %arg6[%189, %c0_52] : memref<8x8xf32, #tpu.memory_space<vmem>>, vector<1x8xf32>
    %191 = vector.shape_cast %190 : vector<1x8xf32> to vector<8xf32>
    %192 = vector.shape_cast %188 : vector<8xf32> to vector<1x8xf32>
    tpu.vector_store %arg6[%189, %c0_52], %192 {strides = array<i32>} : memref<8x8xf32, #tpu.memory_space<vmem>>, vector<1x8xf32>,
    %c6_i32 = arith.constant 6 : i32
    %193 = arith.addi %0, %c6_i32 : i32
    %c4_i32_53 = arith.constant 4 : i32
    %194 = arith.muli %193, %c4_i32_53 : i32
    %195 = arith.index_cast %194 : i32 to index
    %196 = memref.load %arg1[%195] : memref<32xi32, #tpu.memory_space<smem>>
    %197 = arith.index_cast %196 : i32 to index
    %c0_54 = arith.constant 0 : index
    %198 = vector.load %arg2[%197, %c0_54] : memref<17x8xf32, #tpu.memory_space<vmem>>, vector<1x8xf32>
    %199 = vector.shape_cast %198 : vector<1x8xf32> to vector<8xf32>
    %c1_i32_55 = arith.constant 1 : i32
    %200 = arith.addi %194, %c1_i32_55 : i32
    %201 = arith.index_cast %200 : i32 to index
    %202 = memref.load %arg1[%201] : memref<32xi32, #tpu.memory_space<smem>>
    %203 = arith.index_cast %202 : i32 to index
    %c0_56 = arith.constant 0 : index
    %204 = vector.load %arg2[%203, %c0_56] : memref<17x8xf32, #tpu.memory_space<vmem>>, vector<1x8xf32>
    %205 = vector.shape_cast %204 : vector<1x8xf32> to vector<8xf32>
    %206 = arith.addf %199, %205 : vector<8xf32>
    %c2_i32_57 = arith.constant 2 : i32
    %207 = arith.addi %194, %c2_i32_57 : i32
    %208 = arith.index_cast %207 : i32 to index
    %209 = memref.load %arg1[%208] : memref<32xi32, #tpu.memory_space<smem>>
    %210 = arith.index_cast %209 : i32 to index
    %c0_58 = arith.constant 0 : index
    %211 = vector.load %arg2[%210, %c0_58] : memref<17x8xf32, #tpu.memory_space<vmem>>, vector<1x8xf32>
    %212 = vector.shape_cast %211 : vector<1x8xf32> to vector<8xf32>
    %213 = arith.addf %206, %212 : vector<8xf32>
    %c3_i32_59 = arith.constant 3 : i32
    %214 = arith.addi %194, %c3_i32_59 : i32
    %215 = arith.index_cast %214 : i32 to index
    %216 = memref.load %arg1[%215] : memref<32xi32, #tpu.memory_space<smem>>
    %217 = arith.index_cast %216 : i32 to index
    %c0_60 = arith.constant 0 : index
    %218 = vector.load %arg2[%217, %c0_60] : memref<17x8xf32, #tpu.memory_space<vmem>>, vector<1x8xf32>
    %219 = vector.shape_cast %218 : vector<1x8xf32> to vector<8xf32>
    %220 = arith.addf %213, %219 : vector<8xf32>
    %221 = arith.index_cast %c6_i32 : i32 to index
    %c0_61 = arith.constant 0 : index
    %222 = vector.load %arg6[%221, %c0_61] : memref<8x8xf32, #tpu.memory_space<vmem>>, vector<1x8xf32>
    %223 = vector.shape_cast %222 : vector<1x8xf32> to vector<8xf32>
    %224 = vector.shape_cast %220 : vector<8xf32> to vector<1x8xf32>
    tpu.vector_store %arg6[%221, %c0_61], %224 {strides = array<i32>} : memref<8x8xf32, #tpu.memory_space<vmem>>, vector<1x8xf32>,
    %c7_i32 = arith.constant 7 : i32
    %225 = arith.addi %0, %c7_i32 : i32
    %c4_i32_62 = arith.constant 4 : i32
    %226 = arith.muli %225, %c4_i32_62 : i32
    %227 = arith.index_cast %226 : i32 to index
    %228 = memref.load %arg1[%227] : memref<32xi32, #tpu.memory_space<smem>>
    %229 = arith.index_cast %228 : i32 to index
    %c0_63 = arith.constant 0 : index
    %230 = vector.load %arg2[%229, %c0_63] : memref<17x8xf32, #tpu.memory_space<vmem>>, vector<1x8xf32>
    %231 = vector.shape_cast %230 : vector<1x8xf32> to vector<8xf32>
    %c1_i32_64 = arith.constant 1 : i32
    %232 = arith.addi %226, %c1_i32_64 : i32
    %233 = arith.index_cast %232 : i32 to index
    %234 = memref.load %arg1[%233] : memref<32xi32, #tpu.memory_space<smem>>
    %235 = arith.index_cast %234 : i32 to index
    %c0_65 = arith.constant 0 : index
    %236 = vector.load %arg2[%235, %c0_65] : memref<17x8xf32, #tpu.memory_space<vmem>>, vector<1x8xf32>
    %237 = vector.shape_cast %236 : vector<1x8xf32> to vector<8xf32>
    %238 = arith.addf %231, %237 : vector<8xf32>
    %c2_i32_66 = arith.constant 2 : i32
    %239 = arith.addi %226, %c2_i32_66 : i32
    %240 = arith.index_cast %239 : i32 to index
    %241 = memref.load %arg1[%240] : memref<32xi32, #tpu.memory_space<smem>>
    %242 = arith.index_cast %241 : i32 to index
    %c0_67 = arith.constant 0 : index
    %243 = vector.load %arg2[%242, %c0_67] : memref<17x8xf32, #tpu.memory_space<vmem>>, vector<1x8xf32>
    %244 = vector.shape_cast %243 : vector<1x8xf32> to vector<8xf32>
    %245 = arith.addf %238, %244 : vector<8xf32>
    %c3_i32_68 = arith.constant 3 : i32
    %246 = arith.addi %226, %c3_i32_68 : i32
    %247 = arith.index_cast %246 : i32 to index
    %248 = memref.load %arg1[%247] : memref<32xi32, #tpu.memory_space<smem>>
    %249 = arith.index_cast %248 : i32 to index
    %c0_69 = arith.constant 0 : index
    %250 = vector.load %arg2[%249, %c0_69] : memref<17x8xf32, #tpu.memory_space<vmem>>, vector<1x8xf32>
    %251 = vector.shape_cast %250 : vector<1x8xf32> to vector<8xf32>
    %252 = arith.addf %245, %251 : vector<8xf32>
    %253 = arith.index_cast %c7_i32 : i32 to index
    %c0_70 = arith.constant 0 : index
    %254 = vector.load %arg6[%253, %c0_70] : memref<8x8xf32, #tpu.memory_space<vmem>>, vector<1x8xf32>
    %255 = vector.shape_cast %254 : vector<1x8xf32> to vector<8xf32>
    %256 = vector.shape_cast %252 : vector<8xf32> to vector<1x8xf32>
    tpu.vector_store %arg6[%253, %c0_70], %256 {strides = array<i32>} : memref<8x8xf32, #tpu.memory_space<vmem>>, vector<1x8xf32>,
    %c8_i32_71 = arith.constant 8 : i32
    %c0_72 = arith.constant 0 : index
    %c0_73 = arith.constant 0 : index
    %257 = vector.load %arg6[%c0_72, %c0_73] : memref<8x8xf32, #tpu.memory_space<vmem>>, vector<8x8xf32>
    %c0_74 = arith.constant 0 : index
    %c0_75 = arith.constant 0 : index
    %258 = vector.load %arg3[%c0_74, %c0_75] : memref<1x8xf32, #tpu.memory_space<vmem>>, vector<1x8xf32>
    %259 = vector.broadcast %258 : vector<1x8xf32> to vector<8x8xf32>
    %260 = arith.mulf %257, %259 : vector<8x8xf32>
    %cst = arith.constant dense<0.000000e+00> : vector<8xf32>
    %261 = vector.multi_reduction <add>, %260, %cst [1] : vector<8x8xf32> to vector<8xf32>
    %262 = vector.shape_cast %261 : vector<8xf32> to vector<1x8xf32>
    %c0_76 = arith.constant 0 : index
    %c0_77 = arith.constant 0 : index
    %263 = vector.load %arg4[%c0_76, %c0_77] : memref<1x1xf32, #tpu.memory_space<vmem>>, vector<1x1xf32>
    %264 = vector.broadcast %263 : vector<1x1xf32> to vector<1x8xf32>
    %265 = arith.addf %262, %264 : vector<1x8xf32>
    %c0_78 = arith.constant 0 : index
    %c0_79 = arith.constant 0 : index
    %266 = vector.load %arg5[%c0_78, %c0_79] : memref<1x8xf32, #tpu.memory_space<vmem>>, vector<1x8xf32>
    tpu.vector_store %arg5[%c0_78, %c0_79], %265 {strides = array<i32>} : memref<1x8xf32, #tpu.memory_space<vmem>>, vector<1x8xf32>,
    return
  }
  func.func @transform_0(%arg0: i32, %arg1: memref<32xi32, #tpu.memory_space<smem>>) -> (i32, i32) {
    %c0_i32 = arith.constant 0 : i32
    %c0_i32_0 = arith.constant 0 : i32
    %c0_i32_1 = arith.constant 0 : i32
    return %c0_i32, %c0_i32_0 : i32, i32
  }
  func.func @transform_1(%arg0: i32, %arg1: memref<32xi32, #tpu.memory_space<smem>>) -> (i32, i32) {
    %c0_i32 = arith.constant 0 : i32
    %c0_i32_0 = arith.constant 0 : i32
    %c0_i32_1 = arith.constant 0 : i32
    return %c0_i32, %c0_i32_0 : i32, i32
  }
  func.func @transform_2(%arg0: i32, %arg1: memref<32xi32, #tpu.memory_space<smem>>) -> (i32, i32) {
    %c0_i32 = arith.constant 0 : i32
    %c0_i32_0 = arith.constant 0 : i32
    %c0_i32_1 = arith.constant 0 : i32
    return %c0_i32, %c0_i32_0 : i32, i32
  }
  func.func @transform_3(%arg0: i32, %arg1: memref<32xi32, #tpu.memory_space<smem>>) -> (i32, i32) {
    %c0_i32 = arith.constant 0 : i32
    %c0_i32_0 = arith.constant 0 : i32
    return %arg0, %c0_i32 : i32, i32
  }
}

</mosaic_0001>

<llo_original>
// kernel: tpu_custom_call.1
$region0: #{tpu_custom_call.1}
  #allocation0 [shape = 'u32[]', space=smem, size = 0x4, offset = 0x4, fixed_abs, tag = 'smem constant byte address 0x4 - core index']
  #allocation1 [shape = 'u32[144,128]{1,0:T(1,128)}', space=vmem, size = 0x12000, scoped, tag = 'internal scratch']
  #allocation2 [shape = 'f32[8,8]{1,0:T(8,128)}', space=vmem, size = 0x1000, scoped, tag = 'scratch operand']
  #allocation3 [shape = 's32[1]{0}', space=sflag, size = 0x4, scoped, tag = 'scoped memory for tpu_custom_call.1']
  #allocation4 [shape = 'u8[512]{0}', space=smem, size = 0x200, scoped, tag = 'prefetched SMEM operand 0']
  #allocation5 [shape = 'f32[1,1]{1,0:T(1,128)S(1)}', space=vmem, size = 0x200, scoped, tag = 'scoped memory for tpu_custom_call.1']
  %s0 = inlined_call_operand.vmem [shape: s32[32], index: 0, kind: input, shape index: {}]
  %s1 = inlined_call_operand.vmem [shape: f32[17,8], index: 1, kind: input, shape index: {}]
  %s2 = inlined_call_operand.vmem [shape: f32[1,8], index: 2, kind: input, shape index: {}]
  %s3 = inlined_call_operand.<no memory space> [shape: f32[1,1], index: 3, kind: input, shape index: {}]
  %s4 = inlined_call_operand.hbm [shape: f32[1,8], index: 4, kind: output, shape index: {}]
  %s5 = sld [smem:[#allocation0]]
  $region22: #{tpu_custom_call.1} parent=0
    _
  %s7 = ssub.s32 1, %s5
  %s8 = scalar_select 0, %s7, %s5
  %s9 = sshll.u32 %s0, 4
  %s10 = int_to_ptr.vmem [resolvable:$true] %s9
  %12 = dma.vmem_to_smem %s10, 16, [#allocation4], [#allocation3]
  %v13 = vstv %s3
  %14 = vst [vmem:[#allocation5] sm:$0x1] %v13
  %15 = dma.done [#allocation3], 16
  %16 = sfence
  $region1: #{tpu_custom_call.1} parent=0
    #allocation6 [shape = 'u8[512]{0}', space=vmem, size = 0x400, scoped, tag = 'output window, operand 0, single buffered']
    #allocation7 [shape = 's32[1]{0}', space=sflag, size = 0x4, scoped, tag = 'scoped memory for tpu_custom_call.1']
    %17 = vsyncpa [#allocation7], 0
    // Predicated region
    $region2: #{tpu_custom_call.1} parent=1 // pred_check
      _
    $region3: #{tpu_custom_call.1} parent=1 // pred_check_branch
      %19 = sbr.rel (0) target = $region5
    $region4: #{tpu_custom_call.1} parent=1 // pred_region
      _
    $region5: #{tpu_custom_call.1} parent=1 // pred_fallthru
      _
    // Predicated region
    $region6: #{tpu_custom_call.1} parent=1 // pred_check
      _
    $region7: #{tpu_custom_call.1} parent=1 // pred_check_branch
      %21 = sbr.rel (0) target = $region9
    $region8: #{tpu_custom_call.1} parent=1 // pred_region
      _
    $region9: #{tpu_custom_call.1} parent=1 // pred_fallthru
      _
    // Predicated region
    $region10: #{tpu_custom_call.1} parent=1 // pred_check
      _
    $region11: #{tpu_custom_call.1} parent=1 // pred_check_branch
      %23 = sbr.rel (0) target = $region13
    $region12: #{tpu_custom_call.1} parent=1 // pred_region
      _
    $region13: #{tpu_custom_call.1} parent=1 // pred_fallthru
      _
    %s24 = smul.u32 0, 8
    %s25 = smul.u32 0, 32
    %s26 = sld [smem:[#allocation4 + %s25]]
    %s27 = scalar_lea.vmem %s1, %s26
    %v28 = vld [vmem:[%s27] sm:$0x1]
    %s29 = sadd.s32 %s25, 1
    %s30 = sld [smem:[#allocation4 + %s29]]
    %s31 = scalar_lea.vmem %s1, %s30
    %v32 = vld [vmem:[%s31] sm:$0x1]
    %v33 = vadd.f32 %v28, %v32
    %s34 = sadd.s32 %s25, 2
    %s35 = sld [smem:[#allocation4 + %s34]]
    %s36 = scalar_lea.vmem %s1, %s35
    %v37 = vld [vmem:[%s36] sm:$0x1]
    %v38 = vadd.f32 %v33, %v37
    %s39 = sadd.s32 %s25, 3
    %s40 = sld [smem:[#allocation4 + %s39]]
    %s41 = scalar_lea.vmem %s1, %s40
    %v42 = vld [vmem:[%s41] sm:$0x1]
    %v43 = vadd.f32 %v38, %v42
    %vm44 = vcmask 57344
    %45 = vst.msk [vmem:[#allocation2] sm:$0x1] %vm44, %v43
    %s46 = sadd.s32 %s24, 1
    %s47 = smul.u32 %s46, 4
    %s48 = sld [smem:[#allocation4 + %s47]]
    %s49 = scalar_lea.vmem %s1, %s48
    %v50 = vld [vmem:[%s49] sm:$0x1]
    %s51 = sadd.s32 %s47, 1
    %s52 = sld [smem:[#allocation4 + %s51]]
    %s53 = scalar_lea.vmem %s1, %s52
    %v54 = vld [vmem:[%s53] sm:$0x1]
    %v55 = vadd.f32 %v50, %v54
    %s56 = sadd.s32 %s47, 2
    %s57 = sld [smem:[#allocation4 + %s56]]
    %s58 = scalar_lea.vmem %s1, %s57
    %v59 = vld [vmem:[%s58] sm:$0x1]
    %v60 = vadd.f32 %v55, %v59
    %s61 = sadd.s32 %s47, 3
    %s62 = sld [smem:[#allocation4 + %s61]]
    %s63 = scalar_lea.vmem %s1, %s62
    %v64 = vld [vmem:[%s63] sm:$0x1]
    %v65 = vadd.f32 %v60, %v64
    %66 = vst.msk [vmem:[#allocation2 + $0x1] sm:$0x1] %vm44, %v65
    %s67 = sadd.s32 %s24, 2
    %s68 = smul.u32 %s67, 4
    %s69 = sld [smem:[#allocation4 + %s68]]
    %s70 = scalar_lea.vmem %s1, %s69
    %v71 = vld [vmem:[%s70] sm:$0x1]
    %s72 = sadd.s32 %s68, 1
    %s73 = sld [smem:[#allocation4 + %s72]]
    %s74 = scalar_lea.vmem %s1, %s73
    %v75 = vld [vmem:[%s74] sm:$0x1]
    %v76 = vadd.f32 %v71, %v75
    %s77 = sadd.s32 %s68, 2
    %s78 = sld [smem:[#allocation4 + %s77]]
    %s79 = scalar_lea.vmem %s1, %s78
    %v80 = vld [vmem:[%s79] sm:$0x1]
    %v81 = vadd.f32 %v76, %v80
    %s82 = sadd.s32 %s68, 3
    %s83 = sld [smem:[#allocation4 + %s82]]
    %s84 = scalar_lea.vmem %s1, %s83
    %v85 = vld [vmem:[%s84] sm:$0x1]
    %v86 = vadd.f32 %v81, %v85
    %87 = vst.msk [vmem:[#allocation2 + $0x2] sm:$0x1] %vm44, %v86
    %s88 = sadd.s32 %s24, 3
    %s89 = smul.u32 %s88, 4
    %s90 = sld [smem:[#allocation4 + %s89]]
    %s91 = scalar_lea.vmem %s1, %s90
    %v92 = vld [vmem:[%s91] sm:$0x1]
    %s93 = sadd.s32 %s89, 1
    %s94 = sld [smem:[#allocation4 + %s93]]
    %s95 = scalar_lea.vmem %s1, %s94
    %v96 = vld [vmem:[%s95] sm:$0x1]
    %v97 = vadd.f32 %v92, %v96
    %s98 = sadd.s32 %s89, 2
    %s99 = sld [smem:[#allocation4 + %s98]]
    %s100 = scalar_lea.vmem %s1, %s99
    %v101 = vld [vmem:[%s100] sm:$0x1]
    %v102 = vadd.f32 %v97, %v101
    %s103 = sadd.s32 %s89, 3
    %s104 = sld [smem:[#allocation4 + %s103]]
    %s105 = scalar_lea.vmem %s1, %s104
    %v106 = vld [vmem:[%s105] sm:$0x1]
    %v107 = vadd.f32 %v102, %v106
    %108 = vst.msk [vmem:[#allocation2 + $0x3] sm:$0x1] %vm44, %v107
    %s109 = sadd.s32 %s24, 4
    %s110 = smul.u32 %s109, 4
    %s111 = sld [smem:[#allocation4 + %s110]]
    %s112 = scalar_lea.vmem %s1, %s111
    %v113 = vld [vmem:[%s112] sm:$0x1]
    %s114 = sadd.s32 %s110, 1
    %s115 = sld [smem:[#allocation4 + %s114]]
    %s116 = scalar_lea.vmem %s1, %s115
    %v117 = vld [vmem:[%s116] sm:$0x1]
    %v118 = vadd.f32 %v113, %v117
    %s119 = sadd.s32 %s110, 2
    %s120 = sld [smem:[#allocation4 + %s119]]
    %s121 = scalar_lea.vmem %s1, %s120
    %v122 = vld [vmem:[%s121] sm:$0x1]
    %v123 = vadd.f32 %v118, %v122
    %s124 = sadd.s32 %s110, 3
    %s125 = sld [smem:[#allocation4 + %s124]]
    %s126 = scalar_lea.vmem %s1, %s125
    %v127 = vld [vmem:[%s126] sm:$0x1]
    %v128 = vadd.f32 %v123, %v127
    %129 = vst.msk [vmem:[#allocation2 + $0x4] sm:$0x1] %vm44, %v128
    %s130 = sadd.s32 %s24, 5
    %s131 = smul.u32 %s130, 4
    %s132 = sld [smem:[#allocation4 + %s131]]
    %s133 = scalar_lea.vmem %s1, %s132
    %v134 = vld [vmem:[%s133] sm:$0x1]
    %s135 = sadd.s32 %s131, 1
    %s136 = sld [smem:[#allocation4 + %s135]]
    %s137 = scalar_lea.vmem %s1, %s136
    %v138 = vld [vmem:[%s137] sm:$0x1]
    %v139 = vadd.f32 %v134, %v138
    %s140 = sadd.s32 %s131, 2
    %s141 = sld [smem:[#allocation4 + %s140]]
    %s142 = scalar_lea.vmem %s1, %s141
    %v143 = vld [vmem:[%s142] sm:$0x1]
    %v144 = vadd.f32 %v139, %v143
    %s145 = sadd.s32 %s131, 3
    %s146 = sld [smem:[#allocation4 + %s145]]
    %s147 = scalar_lea.vmem %s1, %s146
    %v148 = vld [vmem:[%s147] sm:$0x1]
    %v149 = vadd.f32 %v144, %v148
    %150 = vst.msk [vmem:[#allocation2 + $0x5] sm:$0x1] %vm44, %v149
    %s151 = sadd.s32 %s24, 6
    %s152 = smul.u32 %s151, 4
    %s153 = sld [smem:[#allocation4 + %s152]]
    %s154 = scalar_lea.vmem %s1, %s153
    %v155 = vld [vmem:[%s154] sm:$0x1]
    %s156 = sadd.s32 %s152, 1
    %s157 = sld [smem:[#allocation4 + %s156]]
    %s158 = scalar_lea.vmem %s1, %s157
    %v159 = vld [vmem:[%s158] sm:$0x1]
    %v160 = vadd.f32 %v155, %v159
    %s161 = sadd.s32 %s152, 2
    %s162 = sld [smem:[#allocation4 + %s161]]
    %s163 = scalar_lea.vmem %s1, %s162
    %v164 = vld [vmem:[%s163] sm:$0x1]
    %v165 = vadd.f32 %v160, %v164
    %s166 = sadd.s32 %s152, 3
    %s167 = sld [smem:[#allocation4 + %s166]]
    %s168 = scalar_lea.vmem %s1, %s167
    %v169 = vld [vmem:[%s168] sm:$0x1]
    %v170 = vadd.f32 %v165, %v169
    %171 = vst.msk [vmem:[#allocation2 + $0x6] sm:$0x1] %vm44, %v170
    %s172 = sadd.s32 %s24, 7
    %s173 = smul.u32 %s172, 4
    %s174 = sld [smem:[#allocation4 + %s173]]
    %s175 = scalar_lea.vmem %s1, %s174
    %v176 = vld [vmem:[%s175] sm:$0x1]
    %s177 = sadd.s32 %s173, 1
    %s178 = sld [smem:[#allocation4 + %s177]]
    %s179 = scalar_lea.vmem %s1, %s178
    %v180 = vld [vmem:[%s179] sm:$0x1]
    %v181 = vadd.f32 %v176, %v180
    %s182 = sadd.s32 %s173, 2
    %s183 = sld [smem:[#allocation4 + %s182]]
    %s184 = scalar_lea.vmem %s1, %s183
    %v185 = vld [vmem:[%s184] sm:$0x1]
    %v186 = vadd.f32 %v181, %v185
    %s187 = sadd.s32 %s173, 3
    %s188 = sld [smem:[#allocation4 + %s187]]
    %s189 = scalar_lea.vmem %s1, %s188
    %v190 = vld [vmem:[%s189] sm:$0x1]
    %v191 = vadd.f32 %v186, %v190
    %192 = vst.msk [vmem:[#allocation2 + $0x7] sm:$0x1] %vm44, %v191
    %v193 = vld [vmem:[#allocation2] sm:$0xff]
    %v194 = vld [vmem:[%s2] sm:$0x1]
    %v196 = vlaneseq
    %v197 = vshrl.u32 %v196, 7
    %v198 = vsub.s32 0, %v197
    %v199 = vrot.slane %v194, %v198
    %v201 = vmul.f32 %v193, %v199
    %vm202 = vcmask 64512
    %v203 = vsel %vm202, %v201, 0.0
    %204 = vadd.xlane.f32.xlu0 %v203
    %v205 = vpop.xlane.xlu0 %204
    %v206 = vld [vmem:[#allocation5] sm:$0x1]
    %208 = vset.pattern.permute.xlu0 0
    %209 = vperm.xlu0 %208, %v206
    %v210 = vpop.permute.xlu0 %209
    %v212 = vlaneseq
    %v213 = vshrl.u32 %v212, 7
    %v214 = vsub.s32 0, %v213
    %v215 = vrot.slane %v210, %v214
    %v216 = vadd.f32 %v205, %v215
    %v218 = vlaneseq
    %v219 = vand.u32 %v218, 127
    %v220 = vlaneseq
    %v221 = vshrl.u32 %v220, 7
    %v222 = vsub.s32 %v219, %v221
    %v223 = vrot.slane %v216, %v222
    %225 = vst.msk [vmem:[#allocation6] sm:$0x1] %vm44, %v223
    // Predicated region
    $region14: #{tpu_custom_call.1} parent=1 // pred_check
      _
    $region15: #{tpu_custom_call.1} parent=1 // pred_check_branch
      %227 = sbr.rel (0) target = $region17
    $region16: #{tpu_custom_call.1} parent=1 // pred_region
      %s229 = ssub.s32 16, 16
      %230 = vsyncadd [#allocation7], %s229
      %s232 = sshll.u32 [#allocation6], 4
      %s233 = int_to_ptr.vmem [resolvable:$true] %s232
      %235 = dma.vmem_to_hbm [thread:$0]  %s233, 16, %s4, [#allocation7]
    $region17: #{tpu_custom_call.1} parent=1 // pred_fallthru
      _
    // Predicated region
    $region18: #{tpu_custom_call.1} parent=1 // pred_check
      _
    $region19: #{tpu_custom_call.1} parent=1 // pred_check_branch
      %237 = sbr.rel (0) target = $region21
    $region20: #{tpu_custom_call.1} parent=1 // pred_region
      %238 = dma.done [#allocation7], 16
    $region21: #{tpu_custom_call.1} parent=1 // pred_fallthru
      _
    %239 = vsyncpa [#allocation7], 1

</llo_original>
